<compile_context>
chip_gen: v5e
topology: v5e:2x2
jax: 0.10.0
libtpu: 0.0.40
codegen_flags: <defaults>
</compile_context>

<pallas_src>
import functools

import jax
import jax.numpy as jnp
from jax.experimental import pallas as pl
from jax.experimental.pallas import tpu as pltpu


def _silu(x):
    return x * jax.nn.sigmoid(x)


# ---------------------------------------------------------------------------
# Helpers
# ---------------------------------------------------------------------------
def _row_tile(M, target=512):
    """Row tile: multiple of 8, <= target, >= 2 grid steps when possible."""
    half = (M + 1) // 2
    tile = min(target, ((half + 7) // 8) * 8)
    return max(tile, 8)


def _compiler_params(sems, block_bytes, scratch_bytes=0):
    # Double-buffered blocks + scratch + generous headroom, capped at v7x's
    # 64 MiB physical VMEM so the same limit is valid on every generation.
    limit = 2 * int(block_bytes) + int(scratch_bytes) + (8 << 20)
    limit = max(limit, 16 << 20)
    limit = min(limit, 64 << 20)
    return pltpu.CompilerParams(dimension_semantics=sems,
                                vmem_limit_bytes=limit)


# ---------------------------------------------------------------------------
# 1x1 conv (pointwise) + folded-BN bias + SiLU  ==  row-tiled matmul
# ---------------------------------------------------------------------------
def _pw_bn_silu_kernel(x_ref, w_ref, b_ref, o_ref):
    # x_ref: (TM, Cin), w_ref: (Cin, Cout), b_ref: (1, Cout), o_ref: (TM, Cout)
    acc = jnp.dot(x_ref[...], w_ref[...], preferred_element_type=jnp.float32)
    o_ref[...] = _silu(acc + b_ref[...]).astype(o_ref.dtype)


def conv1x1_bn_silu(x_nhwc, w, b, *, tile_target=512):
    N, H, W, Cin = x_nhwc.shape
    Cout = w.shape[1]
    M = N * H * W
    tile_m = _row_tile(M, tile_target)
    x2d = x_nhwc.reshape(M, Cin)                      # no row padding
    block_bytes = 4 * (tile_m * (Cin + Cout) + Cin * Cout + Cout)
    out = pl.pallas_call(
        _pw_bn_silu_kernel,
        out_shape=jax.ShapeDtypeStruct((M, Cout), x_nhwc.dtype),
        grid_spec=pltpu.PrefetchScalarGridSpec(
            num_scalar_prefetch=0,
            grid=(pl.cdiv(M, tile_m),),               # partial block masked by Pallas
            in_specs=[
                pl.BlockSpec((tile_m, Cin), lambda i: (i, 0)),
                pl.BlockSpec((Cin, Cout), lambda i: (0, 0)),
                pl.BlockSpec((1, Cout), lambda i: (0, 0)),
            ],
            out_specs=pl.BlockSpec((tile_m, Cout), lambda i: (i, 0)),
        ),
        compiler_params=_compiler_params(("parallel",), block_bytes),
    )(x2d, w, b.reshape(1, Cout))
    return out.reshape(N, H, W, Cout)


# ---------------------------------------------------------------------------
# Fused Bottleneck(c_, c_, shortcut, e=1.0):
#   out = x + SiLU(conv3x3_BN(SiLU(conv3x3_BN(x))))          (if shortcut)
#
# One kernel per bottleneck, grid over batch.  The 1-px halo is created in a
# zero-initialized VMEM scratch slab (no HBM pad), the conv1 intermediate stays
# in a second scratch slab, so a bottleneck costs exactly one HBM read of x and
# one HBM write of the result.  Tap loop: 3 sublane-shifted loads (one per kw),
# kh shifts are free leading-dim slices; f32 accumulator, SiLU + residual
# epilogue, single block store.
# ---------------------------------------------------------------------------
def _bottleneck_kernel(x_ref, w1_ref, b1_ref, w2_ref, b2_ref, o_ref,
                       pad1, pad2, *, H, W, C, shortcut):
    x = x_ref[0].astype(jnp.float32)                  # (H, W, C)

    pad1[...] = jnp.zeros_like(pad1)                  # zero halo border
    pad1[1:H + 1, 1:W + 1, :] = x

    def conv3(pad_ref, w_ref, b_ref):
        acc = jnp.broadcast_to(b_ref[...], (H * W, C)).astype(jnp.float32)
        for kw in range(3):                           # sublane shift hoisted
            xw = pad_ref[:, kw:kw + W, :]             # (H+2, W, C)
            for kh in range(3):                       # leading-dim slice: free
                tap = xw[kh:kh + H].reshape(H * W, C)
                acc = acc + jnp.dot(tap, w_ref[kh, kw],
                                    preferred_element_type=jnp.float32)
        return _silu(acc)

    y = conv3(pad1, w1_ref, b1_ref)                   # m.cv1 (Conv3x3+BN+SiLU)

    pad2[...] = jnp.zeros_like(pad2)
    pad2[1:H + 1, 1:W + 1, :] = y.reshape(H, W, C)

    y = conv3(pad2, w2_ref, b2_ref)                   # m.cv2 (Conv3x3+BN+SiLU)
    if shortcut:
        y = y + x.reshape(H * W, C)
    o_ref[0] = y.reshape(H, W, C).astype(o_ref.dtype)


def bottleneck_fused(x_nhwc, w1, b1, w2, b2, *, shortcut=True):
    # x: (N,H,W,C), w1/w2: (3,3,C,C) folded, b1/b2: (C,) folded
    N, H, W, C = x_nhwc.shape
    kernel = functools.partial(_bottleneck_kernel, H=H, W=W, C=C,
                               shortcut=shortcut)
    block_bytes = 4 * (2 * H * W * C + 2 * 9 * C * C + 2 * C)
    scratch_bytes = 4 * 2 * (H + 2) * (W + 2) * C
    out = pl.pallas_call(
        kernel,
        out_shape=jax.ShapeDtypeStruct((N, H, W, C), x_nhwc.dtype),
        grid_spec=pltpu.PrefetchScalarGridSpec(
            num_scalar_prefetch=0,
            grid=(N,),
            in_specs=[
                pl.BlockSpec((1, H, W, C), lambda n: (n, 0, 0, 0)),
                pl.BlockSpec((3, 3, C, C), lambda n: (0, 0, 0, 0)),
                pl.BlockSpec((1, C), lambda n: (0, 0)),
                pl.BlockSpec((3, 3, C, C), lambda n: (0, 0, 0, 0)),
                pl.BlockSpec((1, C), lambda n: (0, 0)),
            ],
            out_specs=pl.BlockSpec((1, H, W, C), lambda n: (n, 0, 0, 0)),
            scratch_shapes=[
                pltpu.VMEM((H + 2, W + 2, C), jnp.float32),
                pltpu.VMEM((H + 2, W + 2, C), jnp.float32),
            ],
        ),
        compiler_params=_compiler_params(("parallel",), block_bytes,
                                         scratch_bytes),
    )(x_nhwc, w1, b1.reshape(1, C), w2, b2.reshape(1, C))
    return out


# ---------------------------------------------------------------------------
# Fused tail: cv3 + cv2 + BN(2c_) + SiLU + cv4(+BN+SiLU), single kernel.
#   z1 = SiLU(m   @ (w3*s1) + t1)       (y1-branch: cv3 then BN half 1)
#   z2 = SiLU(x   @ (w2*s2) + t2)       (y2-branch: cv2 then BN half 2)
#   out = SiLU(z1 @ w4a + z2 @ w4b + b4)
# ---------------------------------------------------------------------------
def _tail_kernel(m_ref, x_ref, w3_ref, t1_ref, w2_ref, t2_ref,
                 w4a_ref, w4b_ref, b4_ref, o_ref):
    z1 = _silu(jnp.dot(m_ref[...], w3_ref[...],
                       preferred_element_type=jnp.float32) + t1_ref[...])
    z2 = _silu(jnp.dot(x_ref[...], w2_ref[...],
                       preferred_element_type=jnp.float32) + t2_ref[...])
    acc = (jnp.dot(z1, w4a_ref[...], preferred_element_type=jnp.float32)
           + jnp.dot(z2, w4b_ref[...], preferred_element_type=jnp.float32)
           + b4_ref[...])
    o_ref[...] = _silu(acc).astype(o_ref.dtype)


def csp_tail(m_nhwc, x_nhwc, tail, *, tile_target=512):
    N, H, W, c_ = m_nhwc.shape
    c1 = x_nhwc.shape[-1]
    c2 = tail["w4a"].shape[-1]
    M = N * H * W
    tile_m = _row_tile(M, tile_target)
    m2d = m_nhwc.reshape(M, c_)                       # no row padding
    x2d = x_nhwc.reshape(M, c1)
    block_bytes = 4 * (tile_m * (c_ + c1 + c2)
                       + c_ * c_ + c1 * c_ + 2 * c_ * c2 + 2 * c_ + c2)
    out = pl.pallas_call(
        _tail_kernel,
        out_shape=jax.ShapeDtypeStruct((M, c2), x_nhwc.dtype),
        grid_spec=pltpu.PrefetchScalarGridSpec(
            num_scalar_prefetch=0,
            grid=(pl.cdiv(M, tile_m),),
            in_specs=[
                pl.BlockSpec((tile_m, c_), lambda i: (i, 0)),
                pl.BlockSpec((tile_m, c1), lambda i: (i, 0)),
                pl.BlockSpec((c_, c_), lambda i: (0, 0)),
                pl.BlockSpec((1, c_), lambda i: (0, 0)),
                pl.BlockSpec((c1, c_), lambda i: (0, 0)),
                pl.BlockSpec((1, c_), lambda i: (0, 0)),
                pl.BlockSpec((c_, c2), lambda i: (0, 0)),
                pl.BlockSpec((c_, c2), lambda i: (0, 0)),
                pl.BlockSpec((1, c2), lambda i: (0, 0)),
            ],
            out_specs=pl.BlockSpec((tile_m, c2), lambda i: (i, 0)),
        ),
        compiler_params=_compiler_params(("parallel",), block_bytes),
    )(m2d, x2d, tail["w3"], tail["t1"], tail["w2"], tail["t2"],
      tail["w4a"], tail["w4b"], tail["b4"])
    return out.reshape(N, H, W, c2)


# ---------------------------------------------------------------------------
# Parameter setup (deterministic, synthetic).  Conv+BN pairs are folded
# (eval-mode BN fold is exact); plain Conv2d weights kept as-is; the standalone
# BN(2c_) is additionally pre-folded into cv2/cv3 for the fused tail kernel.
# ---------------------------------------------------------------------------
def init_conv_bn(key, cin, cout, k):
    k1, k2, k3, k4, k5 = jax.random.split(key, 5)
    if k == 1:
        w = jax.random.normal(k1, (cin, cout), jnp.float32) * 0.2
    else:
        w = jax.random.normal(k1, (k, k, cin, cout), jnp.float32) * 0.2
    gamma = jax.random.uniform(k2, (cout,), jnp.float32, 0.5, 1.5)
    beta = jax.random.normal(k3, (cout,), jnp.float32) * 0.1
    mean = jax.random.normal(k4, (cout,), jnp.float32) * 0.1
    var = jax.random.uniform(k5, (cout,), jnp.float32, 0.5, 1.5)
    eps = 1e-3  # ultralytics Conv BatchNorm2d eps
    scale = gamma / jnp.sqrt(var + eps)
    return w * scale, beta - mean * scale


def init_plain_conv(key, cin, cout):
    return jax.random.normal(key, (cin, cout), jnp.float32) * 0.2


def init_bn(key, c):
    k2, k3, k4, k5 = jax.random.split(key, 4)
    gamma = jax.random.uniform(k2, (c,), jnp.float32, 0.5, 1.5)
    beta = jax.random.normal(k3, (c,), jnp.float32) * 0.1
    mean = jax.random.normal(k4, (c,), jnp.float32) * 0.1
    var = jax.random.uniform(k5, (c,), jnp.float32, 0.5, 1.5)
    eps = 1e-5
    scale = gamma / jnp.sqrt(var + eps)
    return scale, beta - mean * scale


def init_bottleneck_csp_params(key, c1, c2, n=1, e=0.5):
    c_ = int(c2 * e)
    keys = jax.random.split(key, 5 + 2 * n)
    w1, b1 = init_conv_bn(keys[0], c1, c_, 1)          # cv1 (Conv+BN+SiLU)
    w2 = init_plain_conv(keys[1], c1, c_)              # cv2 (plain)
    w3 = init_plain_conv(keys[2], c_, c_)              # cv3 (plain)
    w4, b4 = init_conv_bn(keys[3], 2 * c_, c2, 1)      # cv4 (Conv+BN+SiLU)
    bn_scale, bn_shift = init_bn(keys[4], 2 * c_)      # standalone BN(2c_)

    m = []
    for i in range(n):
        wm1, bm1 = init_conv_bn(keys[5 + 2 * i], c_, c_, 3)
        wm2, bm2 = init_conv_bn(keys[6 + 2 * i], c_, c_, 3)
        m.append({"cv1": (wm1, bm1), "cv2": (wm2, bm2)})

    # Pre-fuse the standalone BN into the linear cv3/cv2 branches for the tail.
    s1, s2 = bn_scale[:c_], bn_scale[c_:]
    t1, t2 = bn_shift[:c_], bn_shift[c_:]
    tail = {
        "w3": w3 * s1, "t1": t1.reshape(1, c_),
        "w2": w2 * s2, "t2": t2.reshape(1, c_),
        "w4a": w4[:c_, :], "w4b": w4[c_:, :], "b4": b4.reshape(1, c2),
    }
    return {
        "cv1": (w1, b1), "m": m, "tail": tail,
        "raw": {"w2": w2, "w3": w3, "w4": w4, "b4": b4,
                "bn_scale": bn_scale, "bn_shift": bn_shift},
    }


# ---------------------------------------------------------------------------
# BottleneckCSP forward (Pallas) -- mirrors the PyTorch module's forward
# ---------------------------------------------------------------------------
def bottleneck_csp_forward(x_nchw, params, n=1, shortcut=True):
    x = jnp.transpose(x_nchw, (0, 2, 3, 1))            # NCHW -> NHWC
    cur = conv1x1_bn_silu(x, *params["cv1"])            # cv1(x)
    for i in range(n):                                  # m = n x Bottleneck(e=1.0)
        p = params["m"][i]
        cur = bottleneck_fused(cur, *p["cv1"], *p["cv2"], shortcut=shortcut)
    # y1 = cv3(m(...)); y2 = cv2(x); out = cv4(silu(bn(cat(y1, y2)))) -- fused
    out = csp_tail(cur, x, params["tail"])
    return jnp.transpose(out, (0, 3, 1, 2))             # NHWC -> NCHW


# ---------------------------------------------------------------------------
# Pure-JAX reference (for correctness check)
# ---------------------------------------------------------------------------
def _ref_pw(x, w, b=None):
    y = jnp.einsum("nhwc,cd->nhwd", x, w)
    if b is not None:
        y = y + b
    return y


def _ref_conv3_bn_silu(x, w, b):
    y = jax.lax.conv_general_dilated(x, w, (1, 1), ((1, 1), (1, 1)),
                                     dimension_numbers=("NHWC", "HWIO", "NHWC"))
    return _silu(y + b)


def bottleneck_csp_reference(x_nchw, params, n=1, shortcut=True):
    x = jnp.transpose(x_nchw, (0, 2, 3, 1))
    w1, b1 = params["cv1"]
    cur = _silu(_ref_pw(x, w1, b1))
    for i in range(n):
        wm1, bm1 = params["m"][i]["cv1"]
        wm2, bm2 = params["m"][i]["cv2"]
        h = _ref_conv3_bn_silu(cur, wm1, bm1)
        h = _ref_conv3_bn_silu(h, wm2, bm2)
        if shortcut:
            h = cur + h
        cur = h
    raw = params["raw"]
    y1 = _ref_pw(cur, raw["w3"])
    y2 = _ref_pw(x, raw["w2"])
    cat = jnp.concatenate([y1, y2], axis=-1)
    z = _silu(cat * raw["bn_scale"] + raw["bn_shift"])
    out = _silu(_ref_pw(z, raw["w4"], raw["b4"]))
    return jnp.transpose(out, (0, 3, 1, 2))


if __name__ == "__main__":
    key = jax.random.PRNGKey(0)
    kx, kp = jax.random.split(key)

    # BottleneckCSP(c1=4, c2=8, n=1, shortcut=True, g=1, e=0.5) -> c_ = 4
    N, C1, H, W = 2, 4, 16, 16
    C2, n, shortcut = 8, 1, True

    x = jax.random.normal(kx, (N, C1, H, W), jnp.float32)
    params = init_bottleneck_csp_params(kp, C1, C2, n=n, e=0.5)

    out = bottleneck_csp_forward(x, params, n=n, shortcut=shortcut)
    out = jax.block_until_ready(out)

    assert out.shape == (N, C2, H, W), out.shape
    ref = bottleneck_csp_reference(x, params, n=n, shortcut=shortcut)
    max_err = float(jnp.max(jnp.abs(out - ref)))
    assert jnp.allclose(out, ref, atol=2e-3, rtol=2e-3), f"max_err={max_err}"

    print("KERNEL_OK")
</pallas_src>

<mosaic_0001>
module attributes {stable_mosaic.version = 11 : i64} {
  func.func @_pw_bn_silu_kernel(%arg0: i32, %arg1: memref<256x4xf32, #tpu.memory_space<vmem>>, %arg2: memref<4x4xf32, #tpu.memory_space<vmem>>, %arg3: memref<1x4xf32, #tpu.memory_space<vmem>>, %arg4: memref<256x4xf32, #tpu.memory_space<vmem>>) attributes {dimension_semantics = [#tpu.dimension_semantics<parallel>], iteration_bounds = array<i64: 2>, scalar_prefetch = 0 : i64, scratch_operands = 0 : i64, tpu.core_type = #tpu.core_type<tc>, window_params = [{transform_indices = @transform_0, window_bounds = array<i64: 256, 4>}, {pipeline_mode = #tpu.pipeline_mode<synchronous>, transform_indices = @transform_1, window_bounds = array<i64: 4, 4>}, {pipeline_mode = #tpu.pipeline_mode<synchronous>, transform_indices = @transform_2, window_bounds = array<i64: 1, 4>}, {transform_indices = @transform_3, window_bounds = array<i64: 256, 4>}]} {
    %c0 = arith.constant 0 : index
    %c0_0 = arith.constant 0 : index
    %0 = vector.load %arg1[%c0, %c0_0] : memref<256x4xf32, #tpu.memory_space<vmem>>, vector<256x4xf32>
    %c0_1 = arith.constant 0 : index
    %c0_2 = arith.constant 0 : index
    %1 = vector.load %arg2[%c0_1, %c0_2] : memref<4x4xf32, #tpu.memory_space<vmem>>, vector<4x4xf32>
    %cst = arith.constant dense<0.000000e+00> : vector<256x4xf32>
    %2 = tpu.matmul %0, %1, %cst {dimension_numbers = #tpu.dot_dimension_numbers<[1], [0], [0], [1], [0, 0, 1, 1], [], []>} : vector<256x4xf32>, vector<4x4xf32>, vector<256x4xf32> -> vector<256x4xf32>
    %c0_3 = arith.constant 0 : index
    %c0_4 = arith.constant 0 : index
    %3 = vector.load %arg3[%c0_3, %c0_4] : memref<1x4xf32, #tpu.memory_space<vmem>>, vector<1x4xf32>
    %4 = vector.broadcast %3 : vector<1x4xf32> to vector<256x4xf32>
    %5 = arith.addf %2, %4 : vector<256x4xf32>
    %6 = arith.negf %5 : vector<256x4xf32>
    %7 = math.exp %6 : vector<256x4xf32>
    %cst_5 = arith.constant 1.000000e+00 : f32
    %8 = vector.broadcast %cst_5 : f32 to vector<256x4xf32>
    %9 = arith.addf %8, %7 : vector<256x4xf32>
    %10 = arith.divf %8, %9 : vector<256x4xf32>
    %11 = arith.mulf %5, %10 : vector<256x4xf32>
    %c0_6 = arith.constant 0 : index
    %c0_7 = arith.constant 0 : index
    %12 = vector.load %arg4[%c0_6, %c0_7] : memref<256x4xf32, #tpu.memory_space<vmem>>, vector<256x4xf32>
    tpu.vector_store %arg4[%c0_6, %c0_7], %11 {strides = array<i32>} : memref<256x4xf32, #tpu.memory_space<vmem>>, vector<256x4xf32>,
    return
  }
  func.func @transform_0(%arg0: i32) -> (i32, i32) {
    %c0_i32 = arith.constant 0 : i32
    %c0_i32_0 = arith.constant 0 : i32
    return %arg0, %c0_i32 : i32, i32
  }
  func.func @transform_1(%arg0: i32) -> (i32, i32) {
    %c0_i32 = arith.constant 0 : i32
    %c0_i32_0 = arith.constant 0 : i32
    %c0_i32_1 = arith.constant 0 : i32
    return %c0_i32, %c0_i32_0 : i32, i32
  }
  func.func @transform_2(%arg0: i32) -> (i32, i32) {
    %c0_i32 = arith.constant 0 : i32
    %c0_i32_0 = arith.constant 0 : i32
    %c0_i32_1 = arith.constant 0 : i32
    return %c0_i32, %c0_i32_0 : i32, i32
  }
  func.func @transform_3(%arg0: i32) -> (i32, i32) {
    %c0_i32 = arith.constant 0 : i32
    %c0_i32_0 = arith.constant 0 : i32
    return %arg0, %c0_i32 : i32, i32
  }
}

</mosaic_0001>

<llo_original>
// kernel: tpu_custom_call.1
$region0: #{tpu_custom_call.1}
  #allocation0 [shape = 'u32[]', space=smem, size = 0x4, offset = 0x4, fixed_abs, tag = 'smem constant byte address 0x4 - core index']
  #allocation1 [shape = 'u32[72,128]{1,0:T(1,128)}', space=vmem, size = 0x9000, scoped, tag = 'internal scratch']
  %s0 = inlined_call_operand.vmem [shape: f32[512,4], index: 0, kind: input, shape index: {}]
  %s1 = inlined_call_operand.vmem [shape: f32[4,4], index: 1, kind: input, shape index: {}]
  %s2 = inlined_call_operand.vmem [shape: f32[1,4], index: 2, kind: input, shape index: {}]
  %s3 = inlined_call_operand.vmem [shape: f32[512,4], index: 3, kind: output, shape index: {}]
  %s4 = sld [smem:[#allocation0]]
  $region45: #{tpu_custom_call.1} parent=0
    _
  %s6 = ssub.s32 1, %s4
  %s7 = scalar_select 0, %s6, %s4
  loop: start=0, step=1, limit=4
  $region2: #{tpu_custom_call.1} parent=0 // loop_pre_header
    _
  $region3: #{tpu_custom_call.1} parent=0 // loop_header
    %s9 = sphi 0, %s13
    %p10 = scmp.ge.s32.totalorder %s9, 4
    %s19 = sphi 0, %s21
    %s22 = sphi 0, %s19
    %s23 = sphi 0, %s22
    %s39 = sphi 0, %s23
    %s43 = sphi 0, %s43
    %s45 = sphi 0, %s43
    %s46 = sphi 0, %s45
    %s60 = sphi 0, %s46
    %s64 = sphi 0, %s64
    %s66 = sphi 0, %s64
    %s67 = sphi 0, %s66
    %s81 = sphi 0, %s67
    %s87 = sphi 0, %s89
    %s90 = sphi 0, %s87
    %s91 = sphi 0, %s90
    %s107 = sphi 0, %s91
  $region4: #{tpu_custom_call.1} parent=0 // loop_header_branch
    %12 = sbr.rel (%p10) target = $region8
  $region5: #{tpu_custom_call.1} parent=0 // loop_body
    %s14 = ssub.s32 %s9, 1
    %s15 = ssub.s32 %s9, 2
    %s16 = sadd.s32 %s9, 1
    %s17 = ssub.s32 %s9, %s16
    %p18 = scmp.eq.s32.totalorder %s17, 0
    %s20 = sadd.s32 %s19, 1
    %s21 = scalar_select %p18, %s19, %s20
    %p24 = pneg %p18
    %p25 = scmp.eq.s32.totalorder %s9, 1
    %p26 = por %p24, %p25
    %p27 = scmp.ne.s32.totalorder %s19, %s22
    %p28 = scmp.eq.s32.totalorder %s9, 0
    %p29 = por %p27, %p28
    %p30 = scmp.ne.s32.totalorder %s19, %s22
    %p31 = scmp.eq.s32.totalorder %s14, 1
    %p32 = por %p30, %p31
    %p33 = scmp.ne.s32.totalorder %s22, %s23
    %p34 = scmp.eq.s32.totalorder %s14, 0
    %p35 = por %p33, %p34
    %p36 = scmp.ne.s32.totalorder %s22, %s23
    %p37 = scmp.eq.s32.totalorder %s15, 1
    %p38 = por %p36, %p37
    %p40 = scmp.ne.s32.totalorder %s23, %s39
    %p41 = scmp.eq.s32.totalorder %s15, 0
    %p42 = por %p40, %p41
    %s44 = sadd.s32 %s43, 1
    %p47 = scmp.eq.s32.totalorder %s9, 1
    %p48 = scmp.ne.s32.totalorder %s43, %s45
    %p49 = scmp.eq.s32.totalorder %s9, 0
    %p50 = por %p48, %p49
    %p51 = scmp.ne.s32.totalorder %s43, %s45
    %p52 = scmp.eq.s32.totalorder %s14, 1
    %p53 = por %p51, %p52
    %p54 = scmp.ne.s32.totalorder %s45, %s46
    %p55 = scmp.eq.s32.totalorder %s14, 0
    %p56 = por %p54, %p55
    %p57 = scmp.ne.s32.totalorder %s45, %s46
    %p58 = scmp.eq.s32.totalorder %s15, 1
    %p59 = por %p57, %p58
    %p61 = scmp.ne.s32.totalorder %s46, %s60
    %p62 = scmp.eq.s32.totalorder %s15, 0
    %p63 = por %p61, %p62
    %s65 = sadd.s32 %s64, 1
    %p68 = scmp.eq.s32.totalorder %s9, 1
    %p69 = scmp.ne.s32.totalorder %s64, %s66
    %p70 = scmp.eq.s32.totalorder %s9, 0
    %p71 = por %p69, %p70
    %p72 = scmp.ne.s32.totalorder %s64, %s66
    %p73 = scmp.eq.s32.totalorder %s14, 1
    %p74 = por %p72, %p73
    %p75 = scmp.ne.s32.totalorder %s66, %s67
    %p76 = scmp.eq.s32.totalorder %s14, 0
    %p77 = por %p75, %p76
    %p78 = scmp.ne.s32.totalorder %s66, %s67
    %p79 = scmp.eq.s32.totalorder %s15, 1
    %p80 = por %p78, %p79
    %p82 = scmp.ne.s32.totalorder %s67, %s81
    %p83 = scmp.eq.s32.totalorder %s15, 0
    %p84 = por %p82, %p83
    %s85 = ssub.s32 %s9, %s16
    %p86 = scmp.eq.s32.totalorder %s85, 0
    %s88 = sadd.s32 %s87, 1
    %s89 = scalar_select %p86, %s87, %s88
    %p92 = pneg %p86
    %p93 = scmp.eq.s32.totalorder %s9, 1
    %p94 = por %p92, %p93
    %p95 = scmp.ne.s32.totalorder %s87, %s90
    %p96 = scmp.eq.s32.totalorder %s9, 0
    %p97 = por %p95, %p96
    %p98 = scmp.ne.s32.totalorder %s87, %s90
    %p99 = scmp.eq.s32.totalorder %s14, 1
    %p100 = por %p98, %p99
    %p101 = scmp.ne.s32.totalorder %s90, %s91
    %p102 = scmp.eq.s32.totalorder %s14, 0
    %p103 = por %p101, %p102
    %p104 = scmp.ne.s32.totalorder %s90, %s91
    %p105 = scmp.eq.s32.totalorder %s15, 1
    %p106 = por %p104, %p105
    %p108 = scmp.ne.s32.totalorder %s91, %s107
    %p109 = scmp.eq.s32.totalorder %s15, 0
    %p110 = por %p108, %p109
    %p111 = scmp.le.s32.totalorder 1, %s9
    %p112 = scmp.lt.s32.totalorder %s9, 3
    %p113 = pnand %p111, %p112
    %p114 = pneg %p113
    // Predicated region
    $region9: #{tpu_custom_call.1} parent=5 // pred_check
      _
    $region10: #{tpu_custom_call.1} parent=5 // pred_check_branch
      %116 = sbr.rel (%p113) target = $region12
    $region11: #{tpu_custom_call.1} parent=5 // pred_region
      %s117 = ssub.s32 %s9, 1
      // Predicated region
      $region13: #{tpu_custom_call.1} parent=11 // pred_check
        %p118 = pneg %p56
      $region14: #{tpu_custom_call.1} parent=11 // pred_check_branch
        %120 = sbr.rel (%p118) target = $region16
      $region15: #{tpu_custom_call.1} parent=11 // pred_region
        _
      $region16: #{tpu_custom_call.1} parent=11 // pred_fallthru
        _
      // Predicated region
      $region17: #{tpu_custom_call.1} parent=11 // pred_check
        %p121 = pneg %p77
      $region18: #{tpu_custom_call.1} parent=11 // pred_check_branch
        %123 = sbr.rel (%p121) target = $region20
      $region19: #{tpu_custom_call.1} parent=11 // pred_region
        _
      $region20: #{tpu_custom_call.1} parent=11 // pred_fallthru
        _
    $region12: #{tpu_custom_call.1} parent=5 // pred_fallthru
      _
    %p124 = scmp.lt.s32.totalorder %s9, 2
    // Predicated region
    $region21: #{tpu_custom_call.1} parent=5 // pred_check
      %p125 = pneg %p124
    $region22: #{tpu_custom_call.1} parent=5 // pred_check_branch
      %127 = sbr.rel (%p125) target = $region24
    $region23: #{tpu_custom_call.1} parent=5 // pred_region
      // Predicated region
      $region25: #{tpu_custom_call.1} parent=23 // pred_check
        %p128 = pneg %p29
      $region26: #{tpu_custom_call.1} parent=23 // pred_check_branch
        %130 = sbr.rel (%p128) target = $region28
      $region27: #{tpu_custom_call.1} parent=23 // pred_region
        %s131 = smul.u32 32, %s9
        %p132 = scmp.lt.s32.totalorder %s131, 63
        %s133 = scalar_select %p132, %s131, 63
        %s134 = smul.addr %s133, 8
        %s135 = scalar_lea.vmem %s0, %s134
        %s136 = smul.u32 32, %s9
      $region28: #{tpu_custom_call.1} parent=23 // pred_fallthru
        _
    $region24: #{tpu_custom_call.1} parent=5 // pred_fallthru
      _
    %p137 = scmp.le.s32.totalorder 1, %s9
    %p138 = scmp.lt.s32.totalorder %s9, 3
    %p139 = pnand %p137, %p138
    %p140 = pneg %p139
    // Predicated region
    $region29: #{tpu_custom_call.1} parent=5 // pred_check
      _
    $region30: #{tpu_custom_call.1} parent=5 // pred_check_branch
      %142 = sbr.rel (%p139) target = $region32
    $region31: #{tpu_custom_call.1} parent=5 // pred_region
      %s143 = ssub.s32 %s9, 1
      %s144 = smul.u32 32, %s14
      %p145 = scmp.lt.s32.totalorder %s144, 63
      %s146 = scalar_select %p145, %s144, 63
      %s147 = smul.addr %s146, 8
      %s148 = scalar_lea.vmem %s0, %s147
      %p149 = pneg %p35
      %p150 = pneg %p32
      %p151 = pneg %p56
      %p152 = pneg %p53
      %p153 = pneg %p77
      %p154 = pneg %p74
      %p155 = pneg %p103
      %p156 = pneg %p100
      %s157 = smul.u32 32, %s14
      %p158 = scmp.lt.s32.totalorder %s157, 63
      %s159 = scalar_select %p158, %s157, 63
      %s160 = smul.addr %s159, 8
      %s161 = scalar_lea.vmem %s3, %s160
      %s162 = smul.u32 32, %s14
      %p163 = scmp.lt.s32.totalorder %s162, 63
      %s164 = scalar_select %p163, %s162, 63
      %s165 = smul.addr %s164, 8
      %s166 = scalar_lea.vmem %s0, %s165
      %s167 = smul.u32 32, %s14
      %s168 = smul.u32 32, %s14
      %p169 = scmp.lt.s32.totalorder %s168, 63
      %s170 = scalar_select %p169, %s168, 63
      %s171 = smul.addr %s170, 8
      %s172 = scalar_lea.vmem %s3, %s171
      %s173 = smul.u32 32, %s14
      %v174 = vld [vmem:[%s166] sm:$0xff]
      %v175 = vld [vmem:[%s166 + $0x8] sm:$0xff]
      %v176 = vld [vmem:[%s166 + $0x10] sm:$0xff]
      %v177 = vld [vmem:[%s166 + $0x18] sm:$0xff]
      %v178 = vld [vmem:[%s166 + $0x20] sm:$0xff]
      %v179 = vld [vmem:[%s166 + $0x28] sm:$0xff]
      %v180 = vld [vmem:[%s166 + $0x30] sm:$0xff]
      %v181 = vld [vmem:[%s166 + $0x38] sm:$0xff]
      %v182 = vld [vmem:[%s166 + $0x40] sm:$0xff]
      %v183 = vld [vmem:[%s166 + $0x48] sm:$0xff]
      %v184 = vld [vmem:[%s166 + $0x50] sm:$0xff]
      %v185 = vld [vmem:[%s166 + $0x58] sm:$0xff]
      %v186 = vld [vmem:[%s166 + $0x60] sm:$0xff]
      %v187 = vld [vmem:[%s166 + $0x68] sm:$0xff]
      %v188 = vld [vmem:[%s166 + $0x70] sm:$0xff]
      %v189 = vld [vmem:[%s166 + $0x78] sm:$0xff]
      %v190 = vld [vmem:[%s166 + $0x80] sm:$0xff]
      %v191 = vld [vmem:[%s166 + $0x88] sm:$0xff]
      %v192 = vld [vmem:[%s166 + $0x90] sm:$0xff]
      %v193 = vld [vmem:[%s166 + $0x98] sm:$0xff]
      %v194 = vld [vmem:[%s166 + $0xa0] sm:$0xff]
      %v195 = vld [vmem:[%s166 + $0xa8] sm:$0xff]
      %v196 = vld [vmem:[%s166 + $0xb0] sm:$0xff]
      %v197 = vld [vmem:[%s166 + $0xb8] sm:$0xff]
      %v198 = vld [vmem:[%s166 + $0xc0] sm:$0xff]
      %v199 = vld [vmem:[%s166 + $0xc8] sm:$0xff]
      %v200 = vld [vmem:[%s166 + $0xd0] sm:$0xff]
      %v201 = vld [vmem:[%s166 + $0xd8] sm:$0xff]
      %v202 = vld [vmem:[%s166 + $0xe0] sm:$0xff]
      %v203 = vld [vmem:[%s166 + $0xe8] sm:$0xff]
      %v204 = vld [vmem:[%s166 + $0xf0] sm:$0xff]
      %v205 = vld [vmem:[%s166 + $0xf8] sm:$0xff]
      %v206 = vld [vmem:[%s1] sm:$0xf]
      %v207 = vld [vmem:[%s2] sm:$0x1]
      %v209 = vperm.slane %v207, 0
      %vm211 = vcmask 31744
      %v213 = vsel %vm211, %v174, 0
      %v216 = vsel %vm211, %v175, 0
      %v219 = vsel %vm211, %v176, 0
      %v222 = vsel %vm211, %v177, 0
      %v225 = vsel %vm211, %v178, 0
      %v228 = vsel %vm211, %v179, 0
      %v231 = vsel %vm211, %v180, 0
      %v234 = vsel %vm211, %v181, 0
      %v237 = vsel %vm211, %v182, 0
      %v240 = vsel %vm211, %v183, 0
      %v243 = vsel %vm211, %v184, 0
      %v246 = vsel %vm211, %v185, 0
      %v249 = vsel %vm211, %v186, 0
      %v252 = vsel %vm211, %v187, 0
      %v255 = vsel %vm211, %v188, 0
      %v258 = vsel %vm211, %v189, 0
      %v261 = vsel %vm211, %v190, 0
      %v264 = vsel %vm211, %v191, 0
      %v267 = vsel %vm211, %v192, 0
      %v270 = vsel %vm211, %v193, 0
      %v273 = vsel %vm211, %v194, 0
      %v276 = vsel %vm211, %v195, 0
      %v279 = vsel %vm211, %v196, 0
      %v282 = vsel %vm211, %v197, 0
      %v285 = vsel %vm211, %v198, 0
      %v288 = vsel %vm211, %v199, 0
      %v291 = vsel %vm211, %v200, 0
      %v294 = vsel %vm211, %v201, 0
      %v297 = vsel %vm211, %v202, 0
      %v300 = vsel %vm211, %v203, 0
      %v303 = vsel %vm211, %v204, 0
      %v306 = vsel %vm211, %v205, 0
      %vm308 = vcmask 1043456
      %v310 = vsel %vm308, %v206, 0
      %312 = vmatpush.msra.mxu0 0.0
      %313 = vmatpush.msra.mxu0 0.0
      %314 = vmatpush.msra.mxu0 0.0
      %315 = vmatpush.msra.mxu0 0.0
      %316 = vmatpush.msra.mxu0 0.0
      %317 = vmatpush.msra.mxu0 0.0
      %318 = vmatpush.msra.mxu0 0.0
      %319 = vmatpush.msra.mxu0 0.0
      %320 = vmatpush.msra.mxu0 0.0
      %321 = vmatpush.msra.mxu0 0.0
      %322 = vmatpush.msra.mxu0 0.0
      %323 = vmatpush.msra.mxu0 0.0
      %324 = vmatpush.msra.mxu0 0.0
      %325 = vmatpush.msra.mxu0 0.0
      %326 = vmatpush.msra.mxu0 0.0
      %327 = vmatpush.msra.mxu0 %v310
      %328 = vmatmul.f32.gmra.mxu0 %v213
      %v329 = vpop.f32.mrf.mxu0
      %v330 = vadd.f32 %v209, %v329
      %331 = vmatmul.f32.gmra.mxu0 %v216
      %v332 = vpop.f32.mrf.mxu0
      %v333 = vadd.f32 %v209, %v332
      %334 = vmatmul.f32.gmra.mxu0 %v219
      %v335 = vpop.f32.mrf.mxu0
      %v336 = vadd.f32 %v209, %v335
      %337 = vmatmul.f32.gmra.mxu0 %v222
      %v338 = vpop.f32.mrf.mxu0
      %v339 = vadd.f32 %v209, %v338
      %340 = vmatmul.f32.gmra.mxu0 %v225
      %v341 = vpop.f32.mrf.mxu0
      %v342 = vadd.f32 %v209, %v341
      %343 = vmatmul.f32.gmra.mxu0 %v228
      %v344 = vpop.f32.mrf.mxu0
      %v345 = vadd.f32 %v209, %v344
      %346 = vmatmul.f32.gmra.mxu0 %v231
      %v347 = vpop.f32.mrf.mxu0
      %v348 = vadd.f32 %v209, %v347
      %349 = vmatmul.f32.gmra.mxu0 %v234
      %v350 = vpop.f32.mrf.mxu0
      %v351 = vadd.f32 %v209, %v350
      %352 = vmatmul.f32.gmra.mxu0 %v237
      %v353 = vpop.f32.mrf.mxu0
      %v354 = vadd.f32 %v209, %v353
      %355 = vmatmul.f32.gmra.mxu0 %v240
      %v356 = vpop.f32.mrf.mxu0
      %v357 = vadd.f32 %v209, %v356
      %358 = vmatmul.f32.gmra.mxu0 %v243
      %v359 = vpop.f32.mrf.mxu0
      %v360 = vadd.f32 %v209, %v359
      %361 = vmatmul.f32.gmra.mxu0 %v246
      %v362 = vpop.f32.mrf.mxu0
      %v363 = vadd.f32 %v209, %v362
      %364 = vmatmul.f32.gmra.mxu0 %v249
      %v365 = vpop.f32.mrf.mxu0
      %v366 = vadd.f32 %v209, %v365
      %367 = vmatmul.f32.gmra.mxu0 %v252
      %v368 = vpop.f32.mrf.mxu0
      %v369 = vadd.f32 %v209, %v368
      %370 = vmatmul.f32.gmra.mxu0 %v255
      %v371 = vpop.f32.mrf.mxu0
      %v372 = vadd.f32 %v209, %v371
      %373 = vmatmul.f32.gmra.mxu0 %v258
      %v374 = vpop.f32.mrf.mxu0
      %v375 = vadd.f32 %v209, %v374
      %376 = vmatmul.f32.gmra.mxu0 %v261
      %v377 = vpop.f32.mrf.mxu0
      %v378 = vadd.f32 %v209, %v377
      %379 = vmatmul.f32.gmra.mxu0 %v264
      %v380 = vpop.f32.mrf.mxu0
      %v381 = vadd.f32 %v209, %v380
      %382 = vmatmul.f32.gmra.mxu0 %v267
      %v383 = vpop.f32.mrf.mxu0
      %v384 = vadd.f32 %v209, %v383
      %385 = vmatmul.f32.gmra.mxu0 %v270
      %v386 = vpop.f32.mrf.mxu0
      %v387 = vadd.f32 %v209, %v386
      %388 = vmatmul.f32.gmra.mxu0 %v273
      %v389 = vpop.f32.mrf.mxu0
      %v390 = vadd.f32 %v209, %v389
      %391 = vmatmul.f32.gmra.mxu0 %v276
      %v392 = vpop.f32.mrf.mxu0
      %v393 = vadd.f32 %v209, %v392
      %394 = vmatmul.f32.gmra.mxu0 %v279
      %v395 = vpop.f32.mrf.mxu0
      %v396 = vadd.f32 %v209, %v395
      %397 = vmatmul.f32.gmra.mxu0 %v282
      %v398 = vpop.f32.mrf.mxu0
      %v399 = vadd.f32 %v209, %v398
      %400 = vmatmul.f32.gmra.mxu0 %v285
      %v401 = vpop.f32.mrf.mxu0
      %v402 = vadd.f32 %v209, %v401
      %403 = vmatmul.f32.gmra.mxu0 %v288
      %v404 = vpop.f32.mrf.mxu0
      %v405 = vadd.f32 %v209, %v404
      %406 = vmatmul.f32.gmra.mxu0 %v291
      %v407 = vpop.f32.mrf.mxu0
      %v408 = vadd.f32 %v209, %v407
      %409 = vmatmul.f32.gmra.mxu0 %v294
      %v410 = vpop.f32.mrf.mxu0
      %v411 = vadd.f32 %v209, %v410
      %412 = vmatmul.f32.gmra.mxu0 %v297
      %v413 = vpop.f32.mrf.mxu0
      %v414 = vadd.f32 %v209, %v413
      %415 = vmatmul.f32.gmra.mxu0 %v300
      %v416 = vpop.f32.mrf.mxu0
      %v417 = vadd.f32 %v209, %v416
      %418 = vmatmul.f32.gmra.mxu0 %v303
      %v419 = vpop.f32.mrf.mxu0
      %v420 = vadd.f32 %v209, %v419
      %421 = vmatmul.f32.gmra.mxu0 %v306
      %v422 = vpop.f32.mrf.mxu0
      %v423 = vadd.f32 %v209, %v422
      %424 = vdwg.mxu0
      %v425 = vxor.u32 %v330, 2147483648
      %v426 = vxor.u32 %v333, 2147483648
      %v427 = vxor.u32 %v336, 2147483648
      %v428 = vxor.u32 %v339, 2147483648
      %v429 = vxor.u32 %v342, 2147483648
      %v430 = vxor.u32 %v345, 2147483648
      %v431 = vxor.u32 %v348, 2147483648
      %v432 = vxor.u32 %v351, 2147483648
      %v433 = vxor.u32 %v354, 2147483648
      %v434 = vxor.u32 %v357, 2147483648
      %v435 = vxor.u32 %v360, 2147483648
      %v436 = vxor.u32 %v363, 2147483648
      %v437 = vxor.u32 %v366, 2147483648
      %v438 = vxor.u32 %v369, 2147483648
      %v439 = vxor.u32 %v372, 2147483648
      %v440 = vxor.u32 %v375, 2147483648
      %v441 = vxor.u32 %v378, 2147483648
      %v442 = vxor.u32 %v381, 2147483648
      %v443 = vxor.u32 %v384, 2147483648
      %v444 = vxor.u32 %v387, 2147483648
      %v445 = vxor.u32 %v390, 2147483648
      %v446 = vxor.u32 %v393, 2147483648
      %v447 = vxor.u32 %v396, 2147483648
      %v448 = vxor.u32 %v399, 2147483648
      %v449 = vxor.u32 %v402, 2147483648
      %v450 = vxor.u32 %v405, 2147483648
      %v451 = vxor.u32 %v408, 2147483648
      %v452 = vxor.u32 %v411, 2147483648
      %v453 = vxor.u32 %v414, 2147483648
      %v454 = vxor.u32 %v417, 2147483648
      %v455 = vxor.u32 %v420, 2147483648
      %v456 = vxor.u32 %v423, 2147483648
      %v457 = vmul.f32 %v425, 1.442695
      %v458 = vpow.pop %v457
      %v459 = vmul.f32 %v426, 1.442695
      %v460 = vpow.pop %v459
      %v461 = vmul.f32 %v427, 1.442695
      %v462 = vpow.pop %v461
      %v463 = vmul.f32 %v428, 1.442695
      %v464 = vpow.pop %v463
      %v465 = vmul.f32 %v429, 1.442695
      %v466 = vpow.pop %v465
      %v467 = vmul.f32 %v430, 1.442695
      %v468 = vpow.pop %v467
      %v469 = vmul.f32 %v431, 1.442695
      %v470 = vpow.pop %v469
      %v471 = vmul.f32 %v432, 1.442695
      %v472 = vpow.pop %v471
      %v473 = vmul.f32 %v433, 1.442695
      %v474 = vpow.pop %v473
      %v475 = vmul.f32 %v434, 1.442695
      %v476 = vpow.pop %v475
      %v477 = vmul.f32 %v435, 1.442695
      %v478 = vpow.pop %v477
      %v479 = vmul.f32 %v436, 1.442695
      %v480 = vpow.pop %v479
      %v481 = vmul.f32 %v437, 1.442695
      %v482 = vpow.pop %v481
      %v483 = vmul.f32 %v438, 1.442695
      %v484 = vpow.pop %v483
      %v485 = vmul.f32 %v439, 1.442695
      %v486 = vpow.pop %v485
      %v487 = vmul.f32 %v440, 1.442695
      %v488 = vpow.pop %v487
      %v489 = vmul.f32 %v441, 1.442695
      %v490 = vpow.pop %v489
      %v491 = vmul.f32 %v442, 1.442695
      %v492 = vpow.pop %v491
      %v493 = vmul.f32 %v443, 1.442695
      %v494 = vpow.pop %v493
      %v495 = vmul.f32 %v444, 1.442695
      %v496 = vpow.pop %v495
      %v497 = vmul.f32 %v445, 1.442695
      %v498 = vpow.pop %v497
      %v499 = vmul.f32 %v446, 1.442695
      %v500 = vpow.pop %v499
      %v501 = vmul.f32 %v447, 1.442695
      %v502 = vpow.pop %v501
      %v503 = vmul.f32 %v448, 1.442695
      %v504 = vpow.pop %v503
      %v505 = vmul.f32 %v449, 1.442695
      %v506 = vpow.pop %v505
      %v507 = vmul.f32 %v450, 1.442695
      %v508 = vpow.pop %v507
      %v509 = vmul.f32 %v451, 1.442695
      %v510 = vpow.pop %v509
      %v511 = vmul.f32 %v452, 1.442695
      %v512 = vpow.pop %v511
      %v513 = vmul.f32 %v453, 1.442695
      %v514 = vpow.pop %v513
      %v515 = vmul.f32 %v454, 1.442695
      %v516 = vpow.pop %v515
      %v517 = vmul.f32 %v455, 1.442695
      %v518 = vpow.pop %v517
      %v519 = vmul.f32 %v456, 1.442695
      %v520 = vpow.pop %v519
      %v521 = vadd.f32 %v458, 1.0
      %v522 = vadd.f32 %v460, 1.0
      %v523 = vadd.f32 %v462, 1.0
      %v524 = vadd.f32 %v464, 1.0
      %v525 = vadd.f32 %v466, 1.0
      %v526 = vadd.f32 %v468, 1.0
      %v527 = vadd.f32 %v470, 1.0
      %v528 = vadd.f32 %v472, 1.0
      %v529 = vadd.f32 %v474, 1.0
      %v530 = vadd.f32 %v476, 1.0
      %v531 = vadd.f32 %v478, 1.0
      %v532 = vadd.f32 %v480, 1.0
      %v533 = vadd.f32 %v482, 1.0
      %v534 = vadd.f32 %v484, 1.0
      %v535 = vadd.f32 %v486, 1.0
      %v536 = vadd.f32 %v488, 1.0
      %v537 = vadd.f32 %v490, 1.0
      %v538 = vadd.f32 %v492, 1.0
      %v539 = vadd.f32 %v494, 1.0
      %v540 = vadd.f32 %v496, 1.0
      %v541 = vadd.f32 %v498, 1.0
      %v542 = vadd.f32 %v500, 1.0
      %v543 = vadd.f32 %v502, 1.0
      %v544 = vadd.f32 %v504, 1.0
      %v545 = vadd.f32 %v506, 1.0
      %v546 = vadd.f32 %v508, 1.0
      %v547 = vadd.f32 %v510, 1.0
      %v548 = vadd.f32 %v512, 1.0
      %v549 = vadd.f32 %v514, 1.0
      %v550 = vadd.f32 %v516, 1.0
      %v551 = vadd.f32 %v518, 1.0
      %v552 = vadd.f32 %v520, 1.0
      %v553 = vrcp.pop %v521
      %v554 = vmul.f32 %v521, %v553
      %v555 = vsub.f32 1.0, %v554
      %v556 = vmul.f32 %v553, %v555
      %v557 = vadd.f32 %v553, %v556
      %vm558 = vweird.f32 %v521
      %vm559 = vweird.f32 %v553
      %vm560 = vmor %vm558, %vm559
      %v561 = vsel %vm560, %v553, %v557
      %v562 = vand.u32 2147483647, %v521
      %vm563 = vcmp.eq.f32.partialorder %v562, 8.507059e+37
      %v564 = vand.u32 %v521, 2147483648
      %v565 = vor.u32 1.1754944e-38, %v564
      %v566 = vsel %vm563, %v565, %v561
      %v567 = vmul.f32 1.0, %v566
      %v568 = vrcp.pop %v522
      %v569 = vmul.f32 %v522, %v568
      %v570 = vsub.f32 1.0, %v569
      %v571 = vmul.f32 %v568, %v570
      %v572 = vadd.f32 %v568, %v571
      %vm573 = vweird.f32 %v522
      %vm574 = vweird.f32 %v568
      %vm575 = vmor %vm573, %vm574
      %v576 = vsel %vm575, %v568, %v572
      %v577 = vand.u32 2147483647, %v522
      %vm578 = vcmp.eq.f32.partialorder %v577, 8.507059e+37
      %v579 = vand.u32 %v522, 2147483648
      %v580 = vor.u32 1.1754944e-38, %v579
      %v581 = vsel %vm578, %v580, %v576
      %v582 = vmul.f32 1.0, %v581
      %v583 = vrcp.pop %v523
      %v584 = vmul.f32 %v523, %v583
      %v585 = vsub.f32 1.0, %v584
      %v586 = vmul.f32 %v583, %v585
      %v587 = vadd.f32 %v583, %v586
      %vm588 = vweird.f32 %v523
      %vm589 = vweird.f32 %v583
      %vm590 = vmor %vm588, %vm589
      %v591 = vsel %vm590, %v583, %v587
      %v592 = vand.u32 2147483647, %v523
      %vm593 = vcmp.eq.f32.partialorder %v592, 8.507059e+37
      %v594 = vand.u32 %v523, 2147483648
      %v595 = vor.u32 1.1754944e-38, %v594
      %v596 = vsel %vm593, %v595, %v591
      %v597 = vmul.f32 1.0, %v596
      %v598 = vrcp.pop %v524
      %v599 = vmul.f32 %v524, %v598
      %v600 = vsub.f32 1.0, %v599
      %v601 = vmul.f32 %v598, %v600
      %v602 = vadd.f32 %v598, %v601
      %vm603 = vweird.f32 %v524
      %vm604 = vweird.f32 %v598
      %vm605 = vmor %vm603, %vm604
      %v606 = vsel %vm605, %v598, %v602
      %v607 = vand.u32 2147483647, %v524
      %vm608 = vcmp.eq.f32.partialorder %v607, 8.507059e+37
      %v609 = vand.u32 %v524, 2147483648
      %v610 = vor.u32 1.1754944e-38, %v609
      %v611 = vsel %vm608, %v610, %v606
      %v612 = vmul.f32 1.0, %v611
      %v613 = vrcp.pop %v525
      %v614 = vmul.f32 %v525, %v613
      %v615 = vsub.f32 1.0, %v614
      %v616 = vmul.f32 %v613, %v615
      %v617 = vadd.f32 %v613, %v616
      %vm618 = vweird.f32 %v525
      %vm619 = vweird.f32 %v613
      %vm620 = vmor %vm618, %vm619
      %v621 = vsel %vm620, %v613, %v617
      %v622 = vand.u32 2147483647, %v525
      %vm623 = vcmp.eq.f32.partialorder %v622, 8.507059e+37
      %v624 = vand.u32 %v525, 2147483648
      %v625 = vor.u32 1.1754944e-38, %v624
      %v626 = vsel %vm623, %v625, %v621
      %v627 = vmul.f32 1.0, %v626
      %v628 = vrcp.pop %v526
      %v629 = vmul.f32 %v526, %v628
      %v630 = vsub.f32 1.0, %v629
      %v631 = vmul.f32 %v628, %v630
      %v632 = vadd.f32 %v628, %v631
      %vm633 = vweird.f32 %v526
      %vm634 = vweird.f32 %v628
      %vm635 = vmor %vm633, %vm634
      %v636 = vsel %vm635, %v628, %v632
      %v637 = vand.u32 2147483647, %v526
      %vm638 = vcmp.eq.f32.partialorder %v637, 8.507059e+37
      %v639 = vand.u32 %v526, 2147483648
      %v640 = vor.u32 1.1754944e-38, %v639
      %v641 = vsel %vm638, %v640, %v636
      %v642 = vmul.f32 1.0, %v641
      %v643 = vrcp.pop %v527
      %v644 = vmul.f32 %v527, %v643
      %v645 = vsub.f32 1.0, %v644
      %v646 = vmul.f32 %v643, %v645
      %v647 = vadd.f32 %v643, %v646
      %vm648 = vweird.f32 %v527
      %vm649 = vweird.f32 %v643
      %vm650 = vmor %vm648, %vm649
      %v651 = vsel %vm650, %v643, %v647
      %v652 = vand.u32 2147483647, %v527
      %vm653 = vcmp.eq.f32.partialorder %v652, 8.507059e+37
      %v654 = vand.u32 %v527, 2147483648
      %v655 = vor.u32 1.1754944e-38, %v654
      %v656 = vsel %vm653, %v655, %v651
      %v657 = vmul.f32 1.0, %v656
      %v658 = vrcp.pop %v528
      %v659 = vmul.f32 %v528, %v658
      %v660 = vsub.f32 1.0, %v659
      %v661 = vmul.f32 %v658, %v660
      %v662 = vadd.f32 %v658, %v661
      %vm663 = vweird.f32 %v528
      %vm664 = vweird.f32 %v658
      %vm665 = vmor %vm663, %vm664
      %v666 = vsel %vm665, %v658, %v662
      %v667 = vand.u32 2147483647, %v528
      %vm668 = vcmp.eq.f32.partialorder %v667, 8.507059e+37
      %v669 = vand.u32 %v528, 2147483648
      %v670 = vor.u32 1.1754944e-38, %v669
      %v671 = vsel %vm668, %v670, %v666
      %v672 = vmul.f32 1.0, %v671
      %v673 = vrcp.pop %v529
      %v674 = vmul.f32 %v529, %v673
      %v675 = vsub.f32 1.0, %v674
      %v676 = vmul.f32 %v673, %v675
      %v677 = vadd.f32 %v673, %v676
      %vm678 = vweird.f32 %v529
      %vm679 = vweird.f32 %v673
      %vm680 = vmor %vm678, %vm679
      %v681 = vsel %vm680, %v673, %v677
      %v682 = vand.u32 2147483647, %v529
      %vm683 = vcmp.eq.f32.partialorder %v682, 8.507059e+37
      %v684 = vand.u32 %v529, 2147483648
      %v685 = vor.u32 1.1754944e-38, %v684
      %v686 = vsel %vm683, %v685, %v681
      %v687 = vmul.f32 1.0, %v686
      %v688 = vrcp.pop %v530
      %v689 = vmul.f32 %v530, %v688
      %v690 = vsub.f32 1.0, %v689
      %v691 = vmul.f32 %v688, %v690
      %v692 = vadd.f32 %v688, %v691
      %vm693 = vweird.f32 %v530
      %vm694 = vweird.f32 %v688
      %vm695 = vmor %vm693, %vm694
      %v696 = vsel %vm695, %v688, %v692
      %v697 = vand.u32 2147483647, %v530
      %vm698 = vcmp.eq.f32.partialorder %v697, 8.507059e+37
      %v699 = vand.u32 %v530, 2147483648
      %v700 = vor.u32 1.1754944e-38, %v699
      %v701 = vsel %vm698, %v700, %v696
      %v702 = vmul.f32 1.0, %v701
      %v703 = vrcp.pop %v531
      %v704 = vmul.f32 %v531, %v703
      %v705 = vsub.f32 1.0, %v704
      %v706 = vmul.f32 %v703, %v705
      %v707 = vadd.f32 %v703, %v706
      %vm708 = vweird.f32 %v531
      %vm709 = vweird.f32 %v703
      %vm710 = vmor %vm708, %vm709
      %v711 = vsel %vm710, %v703, %v707
      %v712 = vand.u32 2147483647, %v531
      %vm713 = vcmp.eq.f32.partialorder %v712, 8.507059e+37
      %v714 = vand.u32 %v531, 2147483648
      %v715 = vor.u32 1.1754944e-38, %v714
      %v716 = vsel %vm713, %v715, %v711
      %v717 = vmul.f32 1.0, %v716
      %v718 = vrcp.pop %v532
      %v719 = vmul.f32 %v532, %v718
      %v720 = vsub.f32 1.0, %v719
      %v721 = vmul.f32 %v718, %v720
      %v722 = vadd.f32 %v718, %v721
      %vm723 = vweird.f32 %v532
      %vm724 = vweird.f32 %v718
      %vm725 = vmor %vm723, %vm724
      %v726 = vsel %vm725, %v718, %v722
      %v727 = vand.u32 2147483647, %v532
      %vm728 = vcmp.eq.f32.partialorder %v727, 8.507059e+37
      %v729 = vand.u32 %v532, 2147483648
      %v730 = vor.u32 1.1754944e-38, %v729
      %v731 = vsel %vm728, %v730, %v726
      %v732 = vmul.f32 1.0, %v731
      %v733 = vrcp.pop %v533
      %v734 = vmul.f32 %v533, %v733
      %v735 = vsub.f32 1.0, %v734
      %v736 = vmul.f32 %v733, %v735
      %v737 = vadd.f32 %v733, %v736
      %vm738 = vweird.f32 %v533
      %vm739 = vweird.f32 %v733
      %vm740 = vmor %vm738, %vm739
      %v741 = vsel %vm740, %v733, %v737
      %v742 = vand.u32 2147483647, %v533
      %vm743 = vcmp.eq.f32.partialorder %v742, 8.507059e+37
      %v744 = vand.u32 %v533, 2147483648
      %v745 = vor.u32 1.1754944e-38, %v744
      %v746 = vsel %vm743, %v745, %v741
      %v747 = vmul.f32 1.0, %v746
      %v748 = vrcp.pop %v534
      %v749 = vmul.f32 %v534, %v748
      %v750 = vsub.f32 1.0, %v749
      %v751 = vmul.f32 %v748, %v750
      %v752 = vadd.f32 %v748, %v751
      %vm753 = vweird.f32 %v534
      %vm754 = vweird.f32 %v748
      %vm755 = vmor %vm753, %vm754
      %v756 = vsel %vm755, %v748, %v752
      %v757 = vand.u32 2147483647, %v534
      %vm758 = vcmp.eq.f32.partialorder %v757, 8.507059e+37
      %v759 = vand.u32 %v534, 2147483648
      %v760 = vor.u32 1.1754944e-38, %v759
      %v761 = vsel %vm758, %v760, %v756
      %v762 = vmul.f32 1.0, %v761
      %v763 = vrcp.pop %v535
      %v764 = vmul.f32 %v535, %v763
      %v765 = vsub.f32 1.0, %v764
      %v766 = vmul.f32 %v763, %v765
      %v767 = vadd.f32 %v763, %v766
      %vm768 = vweird.f32 %v535
      %vm769 = vweird.f32 %v763
      %vm770 = vmor %vm768, %vm769
      %v771 = vsel %vm770, %v763, %v767
      %v772 = vand.u32 2147483647, %v535
      %vm773 = vcmp.eq.f32.partialorder %v772, 8.507059e+37
      %v774 = vand.u32 %v535, 2147483648
      %v775 = vor.u32 1.1754944e-38, %v774
      %v776 = vsel %vm773, %v775, %v771
      %v777 = vmul.f32 1.0, %v776
      %v778 = vrcp.pop %v536
      %v779 = vmul.f32 %v536, %v778
      %v780 = vsub.f32 1.0, %v779
      %v781 = vmul.f32 %v778, %v780
      %v782 = vadd.f32 %v778, %v781
      %vm783 = vweird.f32 %v536
      %vm784 = vweird.f32 %v778
      %vm785 = vmor %vm783, %vm784
      %v786 = vsel %vm785, %v778, %v782
      %v787 = vand.u32 2147483647, %v536
      %vm788 = vcmp.eq.f32.partialorder %v787, 8.507059e+37
      %v789 = vand.u32 %v536, 2147483648
      %v790 = vor.u32 1.1754944e-38, %v789
      %v791 = vsel %vm788, %v790, %v786
      %v792 = vmul.f32 1.0, %v791
      %v793 = vrcp.pop %v537
      %v794 = vmul.f32 %v537, %v793
      %v795 = vsub.f32 1.0, %v794
      %v796 = vmul.f32 %v793, %v795
      %v797 = vadd.f32 %v793, %v796
      %vm798 = vweird.f32 %v537
      %vm799 = vweird.f32 %v793
      %vm800 = vmor %vm798, %vm799
      %v801 = vsel %vm800, %v793, %v797
      %v802 = vand.u32 2147483647, %v537
      %vm803 = vcmp.eq.f32.partialorder %v802, 8.507059e+37
      %v804 = vand.u32 %v537, 2147483648
      %v805 = vor.u32 1.1754944e-38, %v804
      %v806 = vsel %vm803, %v805, %v801
      %v807 = vmul.f32 1.0, %v806
      %v808 = vrcp.pop %v538
      %v809 = vmul.f32 %v538, %v808
      %v810 = vsub.f32 1.0, %v809
      %v811 = vmul.f32 %v808, %v810
      %v812 = vadd.f32 %v808, %v811
      %vm813 = vweird.f32 %v538
      %vm814 = vweird.f32 %v808
      %vm815 = vmor %vm813, %vm814
      %v816 = vsel %vm815, %v808, %v812
      %v817 = vand.u32 2147483647, %v538
      %vm818 = vcmp.eq.f32.partialorder %v817, 8.507059e+37
      %v819 = vand.u32 %v538, 2147483648
      %v820 = vor.u32 1.1754944e-38, %v819
      %v821 = vsel %vm818, %v820, %v816
      %v822 = vmul.f32 1.0, %v821
      %v823 = vrcp.pop %v539
      %v824 = vmul.f32 %v539, %v823
      %v825 = vsub.f32 1.0, %v824
      %v826 = vmul.f32 %v823, %v825
      %v827 = vadd.f32 %v823, %v826
      %vm828 = vweird.f32 %v539
      %vm829 = vweird.f32 %v823
      %vm830 = vmor %vm828, %vm829
      %v831 = vsel %vm830, %v823, %v827
      %v832 = vand.u32 2147483647, %v539
      %vm833 = vcmp.eq.f32.partialorder %v832, 8.507059e+37
      %v834 = vand.u32 %v539, 2147483648
      %v835 = vor.u32 1.1754944e-38, %v834
      %v836 = vsel %vm833, %v835, %v831
      %v837 = vmul.f32 1.0, %v836
      %v838 = vrcp.pop %v540
      %v839 = vmul.f32 %v540, %v838
      %v840 = vsub.f32 1.0, %v839
      %v841 = vmul.f32 %v838, %v840
      %v842 = vadd.f32 %v838, %v841
      %vm843 = vweird.f32 %v540
      %vm844 = vweird.f32 %v838
      %vm845 = vmor %vm843, %vm844
      %v846 = vsel %vm845, %v838, %v842
      %v847 = vand.u32 2147483647, %v540
      %vm848 = vcmp.eq.f32.partialorder %v847, 8.507059e+37
      %v849 = vand.u32 %v540, 2147483648
      %v850 = vor.u32 1.1754944e-38, %v849
      %v851 = vsel %vm848, %v850, %v846
      %v852 = vmul.f32 1.0, %v851
      %v853 = vrcp.pop %v541
      %v854 = vmul.f32 %v541, %v853
      %v855 = vsub.f32 1.0, %v854
      %v856 = vmul.f32 %v853, %v855
      %v857 = vadd.f32 %v853, %v856
      %vm858 = vweird.f32 %v541
      %vm859 = vweird.f32 %v853
      %vm860 = vmor %vm858, %vm859
      %v861 = vsel %vm860, %v853, %v857
      %v862 = vand.u32 2147483647, %v541
      %vm863 = vcmp.eq.f32.partialorder %v862, 8.507059e+37
      %v864 = vand.u32 %v541, 2147483648
      %v865 = vor.u32 1.1754944e-38, %v864
      %v866 = vsel %vm863, %v865, %v861
      %v867 = vmul.f32 1.0, %v866
      %v868 = vrcp.pop %v542
      %v869 = vmul.f32 %v542, %v868
      %v870 = vsub.f32 1.0, %v869
      %v871 = vmul.f32 %v868, %v870
      %v872 = vadd.f32 %v868, %v871
      %vm873 = vweird.f32 %v542
      %vm874 = vweird.f32 %v868
      %vm875 = vmor %vm873, %vm874
      %v876 = vsel %vm875, %v868, %v872
      %v877 = vand.u32 2147483647, %v542
      %vm878 = vcmp.eq.f32.partialorder %v877, 8.507059e+37
      %v879 = vand.u32 %v542, 2147483648
      %v880 = vor.u32 1.1754944e-38, %v879
      %v881 = vsel %vm878, %v880, %v876
      %v882 = vmul.f32 1.0, %v881
      %v883 = vrcp.pop %v543
      %v884 = vmul.f32 %v543, %v883
      %v885 = vsub.f32 1.0, %v884
      %v886 = vmul.f32 %v883, %v885
      %v887 = vadd.f32 %v883, %v886
      %vm888 = vweird.f32 %v543
      %vm889 = vweird.f32 %v883
      %vm890 = vmor %vm888, %vm889
      %v891 = vsel %vm890, %v883, %v887
      %v892 = vand.u32 2147483647, %v543
      %vm893 = vcmp.eq.f32.partialorder %v892, 8.507059e+37
      %v894 = vand.u32 %v543, 2147483648
      %v895 = vor.u32 1.1754944e-38, %v894
      %v896 = vsel %vm893, %v895, %v891
      %v897 = vmul.f32 1.0, %v896
      %v898 = vrcp.pop %v544
      %v899 = vmul.f32 %v544, %v898
      %v900 = vsub.f32 1.0, %v899
      %v901 = vmul.f32 %v898, %v900
      %v902 = vadd.f32 %v898, %v901
      %vm903 = vweird.f32 %v544
      %vm904 = vweird.f32 %v898
      %vm905 = vmor %vm903, %vm904
      %v906 = vsel %vm905, %v898, %v902
      %v907 = vand.u32 2147483647, %v544
      %vm908 = vcmp.eq.f32.partialorder %v907, 8.507059e+37
      %v909 = vand.u32 %v544, 2147483648
      %v910 = vor.u32 1.1754944e-38, %v909
      %v911 = vsel %vm908, %v910, %v906
      %v912 = vmul.f32 1.0, %v911
      %v913 = vrcp.pop %v545
      %v914 = vmul.f32 %v545, %v913
      %v915 = vsub.f32 1.0, %v914
      %v916 = vmul.f32 %v913, %v915
      %v917 = vadd.f32 %v913, %v916
      %vm918 = vweird.f32 %v545
      %vm919 = vweird.f32 %v913
      %vm920 = vmor %vm918, %vm919
      %v921 = vsel %vm920, %v913, %v917
      %v922 = vand.u32 2147483647, %v545
      %vm923 = vcmp.eq.f32.partialorder %v922, 8.507059e+37
      %v924 = vand.u32 %v545, 2147483648
      %v925 = vor.u32 1.1754944e-38, %v924
      %v926 = vsel %vm923, %v925, %v921
      %v927 = vmul.f32 1.0, %v926
      %v928 = vrcp.pop %v546
      %v929 = vmul.f32 %v546, %v928
      %v930 = vsub.f32 1.0, %v929
      %v931 = vmul.f32 %v928, %v930
      %v932 = vadd.f32 %v928, %v931
      %vm933 = vweird.f32 %v546
      %vm934 = vweird.f32 %v928
      %vm935 = vmor %vm933, %vm934
      %v936 = vsel %vm935, %v928, %v932
      %v937 = vand.u32 2147483647, %v546
      %vm938 = vcmp.eq.f32.partialorder %v937, 8.507059e+37
      %v939 = vand.u32 %v546, 2147483648
      %v940 = vor.u32 1.1754944e-38, %v939
      %v941 = vsel %vm938, %v940, %v936
      %v942 = vmul.f32 1.0, %v941
      %v943 = vrcp.pop %v547
      %v944 = vmul.f32 %v547, %v943
      %v945 = vsub.f32 1.0, %v944
      %v946 = vmul.f32 %v943, %v945
      %v947 = vadd.f32 %v943, %v946
      %vm948 = vweird.f32 %v547
      %vm949 = vweird.f32 %v943
      %vm950 = vmor %vm948, %vm949
      %v951 = vsel %vm950, %v943, %v947
      %v952 = vand.u32 2147483647, %v547
      %vm953 = vcmp.eq.f32.partialorder %v952, 8.507059e+37
      %v954 = vand.u32 %v547, 2147483648
      %v955 = vor.u32 1.1754944e-38, %v954
      %v956 = vsel %vm953, %v955, %v951
      %v957 = vmul.f32 1.0, %v956
      %v958 = vrcp.pop %v548
      %v959 = vmul.f32 %v548, %v958
      %v960 = vsub.f32 1.0, %v959
      %v961 = vmul.f32 %v958, %v960
      %v962 = vadd.f32 %v958, %v961
      %vm963 = vweird.f32 %v548
      %vm964 = vweird.f32 %v958
      %vm965 = vmor %vm963, %vm964
      %v966 = vsel %vm965, %v958, %v962
      %v967 = vand.u32 2147483647, %v548
      %vm968 = vcmp.eq.f32.partialorder %v967, 8.507059e+37
      %v969 = vand.u32 %v548, 2147483648
      %v970 = vor.u32 1.1754944e-38, %v969
      %v971 = vsel %vm968, %v970, %v966
      %v972 = vmul.f32 1.0, %v971
      %v973 = vrcp.pop %v549
      %v974 = vmul.f32 %v549, %v973
      %v975 = vsub.f32 1.0, %v974
      %v976 = vmul.f32 %v973, %v975
      %v977 = vadd.f32 %v973, %v976
      %vm978 = vweird.f32 %v549
      %vm979 = vweird.f32 %v973
      %vm980 = vmor %vm978, %vm979
      %v981 = vsel %vm980, %v973, %v977
      %v982 = vand.u32 2147483647, %v549
      %vm983 = vcmp.eq.f32.partialorder %v982, 8.507059e+37
      %v984 = vand.u32 %v549, 2147483648
      %v985 = vor.u32 1.1754944e-38, %v984
      %v986 = vsel %vm983, %v985, %v981
      %v987 = vmul.f32 1.0, %v986
      %v988 = vrcp.pop %v550
      %v989 = vmul.f32 %v550, %v988
      %v990 = vsub.f32 1.0, %v989
      %v991 = vmul.f32 %v988, %v990
      %v992 = vadd.f32 %v988, %v991
      %vm993 = vweird.f32 %v550
      %vm994 = vweird.f32 %v988
      %vm995 = vmor %vm993, %vm994
      %v996 = vsel %vm995, %v988, %v992
      %v997 = vand.u32 2147483647, %v550
      %vm998 = vcmp.eq.f32.partialorder %v997, 8.507059e+37
      %v999 = vand.u32 %v550, 2147483648
      %v1000 = vor.u32 1.1754944e-38, %v999
      %v1001 = vsel %vm998, %v1000, %v996
      %v1002 = vmul.f32 1.0, %v1001
      %v1003 = vrcp.pop %v551
      %v1004 = vmul.f32 %v551, %v1003
      %v1005 = vsub.f32 1.0, %v1004
      %v1006 = vmul.f32 %v1003, %v1005
      %v1007 = vadd.f32 %v1003, %v1006
      %vm1008 = vweird.f32 %v551
      %vm1009 = vweird.f32 %v1003
      %vm1010 = vmor %vm1008, %vm1009
      %v1011 = vsel %vm1010, %v1003, %v1007
      %v1012 = vand.u32 2147483647, %v551
      %vm1013 = vcmp.eq.f32.partialorder %v1012, 8.507059e+37
      %v1014 = vand.u32 %v551, 2147483648
      %v1015 = vor.u32 1.1754944e-38, %v1014
      %v1016 = vsel %vm1013, %v1015, %v1011
      %v1017 = vmul.f32 1.0, %v1016
      %v1018 = vrcp.pop %v552
      %v1019 = vmul.f32 %v552, %v1018
      %v1020 = vsub.f32 1.0, %v1019
      %v1021 = vmul.f32 %v1018, %v1020
      %v1022 = vadd.f32 %v1018, %v1021
      %vm1023 = vweird.f32 %v552
      %vm1024 = vweird.f32 %v1018
      %vm1025 = vmor %vm1023, %vm1024
      %v1026 = vsel %vm1025, %v1018, %v1022
      %v1027 = vand.u32 2147483647, %v552
      %vm1028 = vcmp.eq.f32.partialorder %v1027, 8.507059e+37
      %v1029 = vand.u32 %v552, 2147483648
      %v1030 = vor.u32 1.1754944e-38, %v1029
      %v1031 = vsel %vm1028, %v1030, %v1026
      %v1032 = vmul.f32 1.0, %v1031
      %v1033 = vmul.f32 %v330, %v567
      %v1034 = vmul.f32 %v333, %v582
      %v1035 = vmul.f32 %v336, %v597
      %v1036 = vmul.f32 %v339, %v612
      %v1037 = vmul.f32 %v342, %v627
      %v1038 = vmul.f32 %v345, %v642
      %v1039 = vmul.f32 %v348, %v657
      %v1040 = vmul.f32 %v351, %v672
      %v1041 = vmul.f32 %v354, %v687
      %v1042 = vmul.f32 %v357, %v702
      %v1043 = vmul.f32 %v360, %v717
      %v1044 = vmul.f32 %v363, %v732
      %v1045 = vmul.f32 %v366, %v747
      %v1046 = vmul.f32 %v369, %v762
      %v1047 = vmul.f32 %v372, %v777
      %v1048 = vmul.f32 %v375, %v792
      %v1049 = vmul.f32 %v378, %v807
      %v1050 = vmul.f32 %v381, %v822
      %v1051 = vmul.f32 %v384, %v837
      %v1052 = vmul.f32 %v387, %v852
      %v1053 = vmul.f32 %v390, %v867
      %v1054 = vmul.f32 %v393, %v882
      %v1055 = vmul.f32 %v396, %v897
      %v1056 = vmul.f32 %v399, %v912
      %v1057 = vmul.f32 %v402, %v927
      %v1058 = vmul.f32 %v405, %v942
      %v1059 = vmul.f32 %v408, %v957
      %v1060 = vmul.f32 %v411, %v972
      %v1061 = vmul.f32 %v414, %v987
      %v1062 = vmul.f32 %v417, %v1002
      %v1063 = vmul.f32 %v420, %v1017
      %v1064 = vmul.f32 %v423, %v1032
      %1065 = vst.msk [vmem:[%s172] sm:$0xff] %vm211, %v1033
      %1066 = vst.msk [vmem:[%s172 + $0x8] sm:$0xff] %vm211, %v1034
      %1067 = vst.msk [vmem:[%s172 + $0x10] sm:$0xff] %vm211, %v1035
      %1068 = vst.msk [vmem:[%s172 + $0x18] sm:$0xff] %vm211, %v1036
      %1069 = vst.msk [vmem:[%s172 + $0x20] sm:$0xff] %vm211, %v1037
      %1070 = vst.msk [vmem:[%s172 + $0x28] sm:$0xff] %vm211, %v1038
      %1071 = vst.msk [vmem:[%s172 + $0x30] sm:$0xff] %vm211, %v1039
      %1072 = vst.msk [vmem:[%s172 + $0x38] sm:$0xff] %vm211, %v1040
      %1073 = vst.msk [vmem:[%s172 + $0x40] sm:$0xff] %vm211, %v1041
      %1074 = vst.msk [vmem:[%s172 + $0x48] sm:$0xff] %vm211, %v1042
      %1075 = vst.msk [vmem:[%s172 + $0x50] sm:$0xff] %vm211, %v1043
      %1076 = vst.msk [vmem:[%s172 + $0x58] sm:$0xff] %vm211, %v1044
      %1077 = vst.msk [vmem:[%s172 + $0x60] sm:$0xff] %vm211, %v1045
      %1078 = vst.msk [vmem:[%s172 + $0x68] sm:$0xff] %vm211, %v1046
      %1079 = vst.msk [vmem:[%s172 + $0x70] sm:$0xff] %vm211, %v1047
      %1080 = vst.msk [vmem:[%s172 + $0x78] sm:$0xff] %vm211, %v1048
      %1081 = vst.msk [vmem:[%s172 + $0x80] sm:$0xff] %vm211, %v1049
      %1082 = vst.msk [vmem:[%s172 + $0x88] sm:$0xff] %vm211, %v1050
      %1083 = vst.msk [vmem:[%s172 + $0x90] sm:$0xff] %vm211, %v1051
      %1084 = vst.msk [vmem:[%s172 + $0x98] sm:$0xff] %vm211, %v1052
      %1085 = vst.msk [vmem:[%s172 + $0xa0] sm:$0xff] %vm211, %v1053
      %1086 = vst.msk [vmem:[%s172 + $0xa8] sm:$0xff] %vm211, %v1054
      %1087 = vst.msk [vmem:[%s172 + $0xb0] sm:$0xff] %vm211, %v1055
      %1088 = vst.msk [vmem:[%s172 + $0xb8] sm:$0xff] %vm211, %v1056
      %1089 = vst.msk [vmem:[%s172 + $0xc0] sm:$0xff] %vm211, %v1057
      %1090 = vst.msk [vmem:[%s172 + $0xc8] sm:$0xff] %vm211, %v1058
      %1091 = vst.msk [vmem:[%s172 + $0xd0] sm:$0xff] %vm211, %v1059
      %1092 = vst.msk [vmem:[%s172 + $0xd8] sm:$0xff] %vm211, %v1060
      %1093 = vst.msk [vmem:[%s172 + $0xe0] sm:$0xff] %vm211, %v1061
      %1094 = vst.msk [vmem:[%s172 + $0xe8] sm:$0xff] %vm211, %v1062
      %1095 = vst.msk [vmem:[%s172 + $0xf0] sm:$0xff] %vm211, %v1063
      %1096 = vst.msk [vmem:[%s172 + $0xf8] sm:$0xff] %vm211, %v1064
      %s1097 = smul.u32 32, %s14
      %p1098 = scmp.lt.s32.totalorder %s1097, 63
      %s1099 = scalar_select %p1098, %s1097, 63
      %s1100 = smul.addr %s1099, 8
      %s1101 = scalar_lea.vmem %s3, %s1100
      // Predicated region
      $region33: #{tpu_custom_call.1} parent=31 // pred_check
        %p1102 = pneg %p100
      $region34: #{tpu_custom_call.1} parent=31 // pred_check_branch
        %1104 = sbr.rel (%p1102) target = $region36
      $region35: #{tpu_custom_call.1} parent=31 // pred_region
        %s1105 = smul.u32 32, %s14
      $region36: #{tpu_custom_call.1} parent=31 // pred_fallthru
        _
    $region32: #{tpu_custom_call.1} parent=5 // pred_fallthru
      _
    %p1106 = scmp.le.s32.totalorder 2, %s9
    // Predicated region
    $region37: #{tpu_custom_call.1} parent=5 // pred_check
      %p1107 = pneg %p1106
    $region38: #{tpu_custom_call.1} parent=5 // pred_check_branch
      %1109 = sbr.rel (%p1107) target = $region40
    $region39: #{tpu_custom_call.1} parent=5 // pred_region
      %s1110 = ssub.s32 %s9, 2
      // Predicated region
      $region41: #{tpu_custom_call.1} parent=39 // pred_check
        %p1111 = pneg %p106
      $region42: #{tpu_custom_call.1} parent=39 // pred_check_branch
        %1113 = sbr.rel (%p1111) target = $region44
      $region43: #{tpu_custom_call.1} parent=39 // pred_region
        %s1114 = smul.u32 32, %s15
        %p1115 = scmp.lt.s32.totalorder %s1114, 63
        %s1116 = scalar_select %p1115, %s1114, 63
        %s1117 = smul.addr %s1116, 8
        %s1118 = scalar_lea.vmem %s3, %s1117
      $region44: #{tpu_custom_call.1} parent=39 // pred_fallthru
        _
    $region40: #{tpu_custom_call.1} parent=5 // pred_fallthru
      _
  $region6: #{tpu_custom_call.1} parent=0 // loop_footer
    %s13 = sadd.s32 1, %s9
  $region7: #{tpu_custom_call.1} parent=0 // loop_footer_branch
    %8 = sbr.rel target = $region3
  $region8: #{tpu_custom_call.1} parent=0 // loop_exit
    _

</llo_original>
